<compile_context>
chip_gen: v7x
topology: tpu7x:2x2x1
jax: 0.10.0
libtpu: 0.0.40
codegen_flags: <defaults>
</compile_context>

<pallas_src>
import functools

import jax
import jax.numpy as jnp
from jax.experimental import pallas as pl
from jax.experimental.pallas import tpu as pltpu

LANES = 128
SUBLANES = 8
MAX_TILE_ROWS = 2048            # 2048*128*4 B = 1 MiB per f32 block
NUM_CORES = 2                   # "parallel" leading axis: both TCs on v7x, no-op on 1-TC chips
VMEM_LIMIT_BYTES = 32 * 1024 * 1024


def _round_up(x, m):
    return ((x + m - 1) // m) * m


def _cdiv(a, b):
    return -(-a // b)


# --------------------------------------------------------------------------- #
# Kernel 1: streamed |pred - targets| partial sums (hot path, HBM-bound).
# Grid = (num_cores [parallel], tiles_per_core [arbitrary]).
# Output block (resident across the tile axis) is the accumulator itself:
# one (tile_rows, 128) f32 slab per core; per-step work is pure VALU adds.
# --------------------------------------------------------------------------- #
def _l1_stream_kernel(p_ref, t_ref, acc_ref, *, tile_rows, tiles_per_core,
                      rows_valid, need_mask):
    i = pl.program_id(1)

    @pl.when(i == 0)
    def _init():
        acc_ref[...] = jnp.zeros_like(acc_ref)

    # In-kernel upcast: inputs are streamed in their native dtype (bf16/f32/...).
    diff = jnp.abs(p_ref[...].astype(jnp.float32) - t_ref[...].astype(jnp.float32))

    if need_mask:  # compile-time: only emitted when tail / dummy blocks exist
        blk = pl.program_id(0) * tiles_per_core + i
        row = blk * tile_rows + jax.lax.broadcasted_iota(
            jnp.int32, (tile_rows, LANES), 0)
        diff = jnp.where(row < rows_valid, diff, 0.0)

    acc_ref[...] += diff            # VALU only; no per-step XLU reduce / scalar store


# --------------------------------------------------------------------------- #
# Kernel 2: one-shot finalize — combine per-core partials, KL term, InfoNCE term.
# All operands are tiny; the InfoNCE branch is compiled out when not needed.
# --------------------------------------------------------------------------- #
def _finalize_kernel(part_ref, mu_ref, lv_ref, z1_ref, z2_ref,
                     total_ref, main_ref, kl_ref, *,
                     inv_temp, inv_n, inv_b, contrast_w, include_contrast):
    part = part_ref[...].astype(jnp.float32)                 # (P, tile_rows, 128)
    part2 = jnp.sum(part, axis=0)                            # (tile_rows, 128)
    main = jnp.sum(part2, keepdims=True) * inv_n             # (1, 1) mean |p - t|

    mu = mu_ref[...].astype(jnp.float32)
    lv = lv_ref[...].astype(jnp.float32)
    kl = -0.5 * jnp.sum(1.0 + lv - mu * mu - jnp.exp(lv), keepdims=True)  # (1, 1)

    total = main + 0.2 * kl

    if include_contrast:  # compile-time flag: no dead MXU/EUP work when aug_z is None
        z1 = z1_ref[...].astype(jnp.float32)
        z2 = z2_ref[...].astype(jnp.float32)
        # F.normalize(p=2, eps=1e-12) via rsqrt (EUP), 1/temp folded into z1.
        z1 = z1 * jax.lax.rsqrt(
            jnp.maximum(jnp.sum(z1 * z1, axis=-1, keepdims=True), 1e-24))
        z2 = z2 * jax.lax.rsqrt(
            jnp.maximum(jnp.sum(z2 * z2, axis=-1, keepdims=True), 1e-24))
        z1 = z1 * inv_temp
        logits = jax.lax.dot_general(
            z1, z2, (((1,), (1,)), ((), ())),
            preferred_element_type=jnp.float32)               # (B, B)
        b = logits.shape[0]
        rr = jax.lax.broadcasted_iota(jnp.int32, (b, b), 0)
        cc = jax.lax.broadcasted_iota(jnp.int32, (b, b), 1)
        diag = jnp.sum(jnp.where(rr == cc, logits, 0.0),
                       axis=-1, keepdims=True)                # (B, 1)
        m = jnp.max(logits, axis=-1, keepdims=True)
        lse = m + jnp.log(jnp.sum(jnp.exp(logits - m), axis=-1, keepdims=True))
        contrast = jnp.sum(lse - diag, keepdims=True) * inv_b  # (1, 1) CE vs arange(B)
        total = total + contrast_w * contrast

    total_ref[...] = total
    main_ref[...] = main
    kl_ref[...] = kl


# --------------------------------------------------------------------------- #
# Wrapper
# --------------------------------------------------------------------------- #
def contrastive_loss(pred0, targets, mu, logvar, z, augmented_z=None,
                     temperature=0.1):
    """total, (main, kl) = ContrastiveLoss(temperature)((pred0, _, (mu, logvar)),
                                                        targets, z, augmented_z)."""
    assert pred0.shape == targets.shape
    assert mu.shape == logvar.shape
    n = int(pred0.size)

    # ---- Stage 1: stream the L1 term in its NATIVE dtype, minimal padding ----
    flat_p = pred0.reshape(-1)
    flat_t = targets.reshape(-1)
    rows = max(1, _cdiv(n, LANES))
    rows_padded = _round_up(rows, SUBLANES)          # pad only to a multiple of 8 rows
    pad = rows_padded * LANES - n
    if pad:
        # < 1024 zero elements; |0 - 0| = 0 so padding never changes the sum.
        flat_p = jnp.pad(flat_p, (0, pad))
        flat_t = jnp.pad(flat_t, (0, pad))
    p2 = flat_p.reshape(rows_padded, LANES)
    t2 = flat_t.reshape(rows_padded, LANES)

    tile_rows = min(MAX_TILE_ROWS, rows_padded)      # multiple of 8 by construction
    num_blocks = _cdiv(rows_padded, tile_rows)
    num_cores = NUM_CORES if num_blocks >= NUM_CORES else 1
    tiles_per_core = _cdiv(num_blocks, num_cores)
    # Tail / dummy blocks (grid coverage > array rows) get masked inside the kernel.
    need_mask = num_cores * tiles_per_core * tile_rows > rows_padded

    stream_kernel = functools.partial(
        _l1_stream_kernel, tile_rows=tile_rows, tiles_per_core=tiles_per_core,
        rows_valid=rows_padded, need_mask=need_mask)

    partials = pl.pallas_call(
        stream_kernel,
        out_shape=jax.ShapeDtypeStruct((num_cores, tile_rows, LANES), jnp.float32),
        grid=(num_cores, tiles_per_core),
        in_specs=[
            pl.BlockSpec((tile_rows, LANES),
                         lambda c, i: (c * tiles_per_core + i, 0)),
            pl.BlockSpec((tile_rows, LANES),
                         lambda c, i: (c * tiles_per_core + i, 0)),
        ],
        out_specs=pl.BlockSpec((None, tile_rows, LANES), lambda c, i: (c, 0, 0)),
        compiler_params=pltpu.CompilerParams(
            dimension_semantics=("parallel", "arbitrary"),
            vmem_limit_bytes=VMEM_LIMIT_BYTES),
    )(p2, t2)

    # ---- Stage 2: tiny finalize kernel (combine + KL + optional InfoNCE) ----
    if augmented_z is None:
        include_contrast, z2, contrast_w = False, z, 0.0   # z2 is a never-read placeholder
    else:
        include_contrast, z2, contrast_w = True, augmented_z, 0.3

    finalize_kernel = functools.partial(
        _finalize_kernel,
        inv_temp=1.0 / float(temperature),
        inv_n=1.0 / float(max(n, 1)),
        inv_b=1.0 / float(z.shape[0]),
        contrast_w=float(contrast_w),
        include_contrast=include_contrast)

    scalar_spec = pl.BlockSpec((1, 1), lambda i: (0, 0))
    total, main, kl = pl.pallas_call(
        finalize_kernel,
        out_shape=(
            jax.ShapeDtypeStruct((1, 1), jnp.float32),
            jax.ShapeDtypeStruct((1, 1), jnp.float32),
            jax.ShapeDtypeStruct((1, 1), jnp.float32),
        ),
        grid=(1,),
        in_specs=[
            pl.BlockSpec((num_cores, tile_rows, LANES), lambda i: (0, 0, 0)),
            pl.BlockSpec(mu.shape, lambda i: (0, 0)),
            pl.BlockSpec(logvar.shape, lambda i: (0, 0)),
            pl.BlockSpec(z.shape, lambda i: (0, 0)),
            pl.BlockSpec(z2.shape, lambda i: (0, 0)),
        ],
        out_specs=(scalar_spec, scalar_spec, scalar_spec),
        compiler_params=pltpu.CompilerParams(
            dimension_semantics=("arbitrary",)),
    )(partials, mu, logvar, z, z2)

    # TODO(synk): PyTorch returns main/kl via .item(); here they are 0-d JAX arrays.
    return total[0, 0], (main[0, 0], kl[0, 0])


def ref_forward(pred0, targets, mu, logvar, z, augmented_z=None, temperature=0.1):
    """Plain-JAX reference matching the PyTorch forward exactly."""
    main = jnp.mean(jnp.abs(pred0 - targets))
    kl = -0.5 * jnp.sum(1.0 + logvar - mu ** 2 - jnp.exp(logvar))
    if augmented_z is not None:
        z1 = z / jnp.maximum(jnp.linalg.norm(z, axis=-1, keepdims=True), 1e-12)
        z2 = augmented_z / jnp.maximum(
            jnp.linalg.norm(augmented_z, axis=-1, keepdims=True), 1e-12)
        logits = (z1 @ z2.T) / temperature
        lse = jax.scipy.special.logsumexp(logits, axis=-1)
        contrast = jnp.mean(lse - jnp.diag(logits))
        total = main + 0.2 * kl + 0.3 * contrast
    else:
        total = main + 0.2 * kl
    return total, (main, kl)


if __name__ == "__main__":
    key = jax.random.PRNGKey(0)
    k1, k2, k3, k4, k5, k6 = jax.random.split(key, 6)

    batch, out_dim, latent_dim, feat_dim = 4, 8, 8, 32
    pred0 = jax.random.normal(k1, (batch, out_dim), jnp.float32)
    targets = jax.random.normal(k2, (batch, out_dim), jnp.float32)
    mu = 0.5 * jax.random.normal(k3, (batch, latent_dim), jnp.float32)
    logvar = 0.1 * jax.random.normal(k4, (batch, latent_dim), jnp.float32)
    z = jax.random.normal(k5, (batch, feat_dim), jnp.float32)
    aug_z = z + 0.05 * jax.random.normal(k6, (batch, feat_dim), jnp.float32)

    total, (main, kl) = contrastive_loss(pred0, targets, mu, logvar, z, aug_z)
    total = jax.block_until_ready(total)

    ref_total, (ref_main, ref_kl) = ref_forward(pred0, targets, mu, logvar, z, aug_z)
    assert jnp.allclose(main, ref_main, atol=1e-5, rtol=1e-5), "main_loss mismatch"
    assert jnp.allclose(kl, ref_kl, atol=1e-4, rtol=1e-4), "kl_loss mismatch"
    assert jnp.allclose(total, ref_total, atol=1e-4, rtol=1e-4), "total_loss mismatch"

    # also exercise the augmented_z is None branch of the forward
    total_nc, _ = contrastive_loss(pred0, targets, mu, logvar, z, None)
    total_nc = jax.block_until_ready(total_nc)
    ref_total_nc, _ = ref_forward(pred0, targets, mu, logvar, z, None)
    assert jnp.allclose(total_nc, ref_total_nc, atol=1e-4, rtol=1e-4), "no-aug mismatch"

    print("KERNEL_OK")
</pallas_src>

<mosaic_0001>
module attributes {stable_mosaic.version = 11 : i64} {
  func.func @_l1_stream_kernel(%arg0: i32, %arg1: i32, %arg2: memref<8x128xf32, #tpu.memory_space<vmem>>, %arg3: memref<8x128xf32, #tpu.memory_space<vmem>>, %arg4: memref<1x8x128xf32, #tpu.memory_space<vmem>>) attributes {dimension_semantics = [#tpu.dimension_semantics<parallel>, #tpu.dimension_semantics<arbitrary>], iteration_bounds = array<i64: 1, 1>, scalar_prefetch = 0 : i64, scratch_operands = 0 : i64, tpu.core_type = #tpu.core_type<tc>, window_params = [{transform_indices = @transform_0, window_bounds = array<i64: 8, 128>}, {transform_indices = @transform_1, window_bounds = array<i64: 8, 128>}, {transform_indices = @transform_2, window_bounds = array<i64: 1, 8, 128>}]} {
    %c0_i32 = arith.constant 0 : i32
    %0 = arith.cmpi eq, %arg1, %c0_i32 : i32
    %1 = arith.extui %0 : i1 to i32
    %c0_i32_0 = arith.constant 0 : i32
    %2 = arith.cmpi ne, %1, %c0_i32_0 : i32
    scf.if %2 {
      %cst = arith.constant 0.000000e+00 : f32
      %13 = vector.broadcast %cst : f32 to vector<8x128xf32>
      %c0_10 = arith.constant 0 : index
      %c0_11 = arith.constant 0 : index
      %c0_12 = arith.constant 0 : index
      %14 = vector.load %arg4[%c0_10, %c0_11, %c0_12] : memref<1x8x128xf32, #tpu.memory_space<vmem>>, vector<1x8x128xf32>
      %15 = vector.shape_cast %14 : vector<1x8x128xf32> to vector<8x128xf32>
      %16 = vector.shape_cast %13 : vector<8x128xf32> to vector<1x8x128xf32>
      tpu.vector_store %arg4[%c0_10, %c0_11, %c0_12], %16 {strides = array<i32>} : memref<1x8x128xf32, #tpu.memory_space<vmem>>, vector<1x8x128xf32>,
    } else {
    }
    %c0 = arith.constant 0 : index
    %c0_1 = arith.constant 0 : index
    %3 = vector.load %arg2[%c0, %c0_1] : memref<8x128xf32, #tpu.memory_space<vmem>>, vector<8x128xf32>
    %c0_2 = arith.constant 0 : index
    %c0_3 = arith.constant 0 : index
    %4 = vector.load %arg3[%c0_2, %c0_3] : memref<8x128xf32, #tpu.memory_space<vmem>>, vector<8x128xf32>
    %5 = arith.subf %3, %4 : vector<8x128xf32>
    %6 = math.absf %5 : vector<8x128xf32>
    %c0_4 = arith.constant 0 : index
    %c0_5 = arith.constant 0 : index
    %c0_6 = arith.constant 0 : index
    %7 = vector.load %arg4[%c0_4, %c0_5, %c0_6] : memref<1x8x128xf32, #tpu.memory_space<vmem>>, vector<1x8x128xf32>
    %8 = vector.shape_cast %7 : vector<1x8x128xf32> to vector<8x128xf32>
    %9 = arith.addf %8, %6 : vector<8x128xf32>
    %c0_7 = arith.constant 0 : index
    %c0_8 = arith.constant 0 : index
    %c0_9 = arith.constant 0 : index
    %10 = vector.load %arg4[%c0_7, %c0_8, %c0_9] : memref<1x8x128xf32, #tpu.memory_space<vmem>>, vector<1x8x128xf32>
    %11 = vector.shape_cast %10 : vector<1x8x128xf32> to vector<8x128xf32>
    %12 = vector.shape_cast %9 : vector<8x128xf32> to vector<1x8x128xf32>
    tpu.vector_store %arg4[%c0_7, %c0_8, %c0_9], %12 {strides = array<i32>} : memref<1x8x128xf32, #tpu.memory_space<vmem>>, vector<1x8x128xf32>,
    return
  }
  func.func @transform_0(%arg0: i32, %arg1: i32) -> (i32, i32) {
    %c1_i32 = arith.constant 1 : i32
    %0 = arith.muli %arg0, %c1_i32 : i32
    %1 = arith.addi %0, %arg1 : i32
    %c0_i32 = arith.constant 0 : i32
    %c0_i32_0 = arith.constant 0 : i32
    return %1, %c0_i32 : i32, i32
  }
  func.func @transform_1(%arg0: i32, %arg1: i32) -> (i32, i32) {
    %c1_i32 = arith.constant 1 : i32
    %0 = arith.muli %arg0, %c1_i32 : i32
    %1 = arith.addi %0, %arg1 : i32
    %c0_i32 = arith.constant 0 : i32
    %c0_i32_0 = arith.constant 0 : i32
    return %1, %c0_i32 : i32, i32
  }
  func.func @transform_2(%arg0: i32, %arg1: i32) -> (i32, i32, i32) {
    %c0_i32 = arith.constant 0 : i32
    %c0_i32_0 = arith.constant 0 : i32
    %c0_i32_1 = arith.constant 0 : i32
    return %arg0, %c0_i32, %c0_i32_0 : i32, i32, i32
  }
}

</mosaic_0001>

<llo_original>
// kernel: tpu_custom_call.1
$region0: #{tpu_custom_call.1}
  #allocation0 [shape = 'u32[]', space=smem, size = 0x4, offset = 0x4, fixed_abs, tag = 'smem constant byte address 0x4 - core index']
  #allocation1 [shape = 'u32[144,128]{1,0:T(1,128)}', space=vmem, size = 0x12000, scoped, tag = 'internal scratch']
  %s0 = inlined_call_operand.hbm [shape: f32[8,128], index: 0, kind: input, shape index: {}]
  %s1 = inlined_call_operand.hbm [shape: f32[8,128], index: 1, kind: input, shape index: {}]
  %s2 = inlined_call_operand.hbm [shape: f32[1,8,128], index: 2, kind: output, shape index: {}]
  %s3 = sld [smem:[#allocation0]]
  $region30: #{tpu_custom_call.1} parent=0
    _
  %s5 = ssub.s32 1, %s3
  %s6 = scalar_select 0, %s5, %s3
  $region1: #{tpu_custom_call.1} parent=0
    #allocation2 [shape = 'u8[4096]{0}', space=vmem, size = 0x1000, scoped, tag = 'input window, operand 0, single buffered']
    #allocation3 [shape = 's32[1]{0}', space=sflag, size = 0x4, scoped, tag = 'scoped memory for tpu_custom_call.1']
    #allocation4 [shape = 's32[1]{0}', space=sflag, size = 0x4, scoped, tag = 'scoped memory for tpu_custom_call.1']
    #allocation5 [shape = 'u8[4096]{0}', space=vmem, size = 0x1000, scoped, tag = 'input window, operand 1, single buffered']
    #allocation6 [shape = 's32[1]{0}', space=sflag, size = 0x4, scoped, tag = 'scoped memory for tpu_custom_call.1']
    #allocation7 [shape = 'u8[4096]{0}', space=vmem, size = 0x1000, scoped, tag = 'output window, operand 0, single buffered']
    %7 = vsyncpa [#allocation3], 0
    %8 = vsyncpa [#allocation6], 0
    %9 = vsyncpa [#allocation4], 0
    // Predicated region
    $region2: #{tpu_custom_call.1} parent=1 // pred_check
      _
    $region3: #{tpu_custom_call.1} parent=1 // pred_check_branch
      %11 = sbr.rel (0) target = $region5
    $region4: #{tpu_custom_call.1} parent=1 // pred_region
      %s12 = sadd.s32 0, 0
      %s14 = ssub.s32 128, 128
      %15 = vsyncadd [#allocation3], %s14
      %s16 = smul.addr %s12, 128
      %s17 = scalar_lea.hbm %s0, %s16
      %s19 = sshll.u32 [#allocation2], 4
      %s20 = int_to_ptr.vmem [resolvable:$true] %s19
      %22 = dma.hbm_to_vmem [thread:$0]  %s17, 128, %s20, [#allocation3]
    $region5: #{tpu_custom_call.1} parent=1 // pred_fallthru
      _
    // Predicated region
    $region6: #{tpu_custom_call.1} parent=1 // pred_check
      _
    $region7: #{tpu_custom_call.1} parent=1 // pred_check_branch
      %24 = sbr.rel (0) target = $region9
    $region8: #{tpu_custom_call.1} parent=1 // pred_region
      %s25 = sadd.s32 0, 0
      %s27 = ssub.s32 128, 128
      %28 = vsyncadd [#allocation6], %s27
      %s29 = smul.addr %s25, 128
      %s30 = scalar_lea.hbm %s1, %s29
      %s32 = sshll.u32 [#allocation5], 4
      %s33 = int_to_ptr.vmem [resolvable:$true] %s32
      %35 = dma.hbm_to_vmem [thread:$0]  %s30, 128, %s33, [#allocation6]
    $region9: #{tpu_custom_call.1} parent=1 // pred_fallthru
      _
    // Predicated region
    $region10: #{tpu_custom_call.1} parent=1 // pred_check
      _
    $region11: #{tpu_custom_call.1} parent=1 // pred_check_branch
      %37 = sbr.rel (0) target = $region13
    $region12: #{tpu_custom_call.1} parent=1 // pred_region
      %38 = dma.done [#allocation3], 128
    $region13: #{tpu_custom_call.1} parent=1 // pred_fallthru
      _
    // Predicated region
    $region14: #{tpu_custom_call.1} parent=1 // pred_check
      _
    $region15: #{tpu_custom_call.1} parent=1 // pred_check_branch
      %40 = sbr.rel (0) target = $region17
    $region16: #{tpu_custom_call.1} parent=1 // pred_region
      %41 = dma.done [#allocation6], 128
    $region17: #{tpu_custom_call.1} parent=1 // pred_fallthru
      _
    %s42 = sadd.s32 0, 0
    %s43 = sadd.s32 0, 0
    %p44 = scmp.eq.s32.totalorder 0, 0
    // Predicated region
    $region18: #{tpu_custom_call.1} parent=1 // pred_check
      %p45 = pneg %p44
    $region19: #{tpu_custom_call.1} parent=1 // pred_check_branch
      %47 = sbr.rel (%p45) target = $region21
    $region20: #{tpu_custom_call.1} parent=1 // pred_region
      %48 = vst [vmem:[#allocation7] sm:$0xff] 0.0
    $region21: #{tpu_custom_call.1} parent=1 // pred_fallthru
      _
    %v49 = vld [vmem:[#allocation2] sm:$0xff]
    %v50 = vld [vmem:[#allocation5] sm:$0xff]
    %v51 = vsub.f32 %v49, %v50
    %v52 = vand.u32 2147483647, %v51
    %v53 = vld [vmem:[#allocation7] sm:$0xff]
    %v54 = vadd.f32 %v53, %v52
    %55 = vst [vmem:[#allocation7] sm:$0xff] %v54
    // Predicated region
    $region22: #{tpu_custom_call.1} parent=1 // pred_check
      _
    $region23: #{tpu_custom_call.1} parent=1 // pred_check_branch
      %57 = sbr.rel (0) target = $region25
    $region24: #{tpu_custom_call.1} parent=1 // pred_region
      %s59 = ssub.s32 128, 128
      %60 = vsyncadd [#allocation4], %s59
      %s62 = sshll.u32 [#allocation7], 4
      %s63 = int_to_ptr.vmem [resolvable:$true] %s62
      %65 = dma.vmem_to_hbm [thread:$0]  %s63, 128, %s2, [#allocation4]
    $region25: #{tpu_custom_call.1} parent=1 // pred_fallthru
      _
    // Predicated region
    $region26: #{tpu_custom_call.1} parent=1 // pred_check
      _
    $region27: #{tpu_custom_call.1} parent=1 // pred_check_branch
      %67 = sbr.rel (0) target = $region29
    $region28: #{tpu_custom_call.1} parent=1 // pred_region
      %68 = dma.done [#allocation4], 128
    $region29: #{tpu_custom_call.1} parent=1 // pred_fallthru
      _
    %69 = vsyncpa [#allocation3], 1
    %70 = vsyncpa [#allocation6], 1
    %71 = vsyncpa [#allocation4], 1

</llo_original>
